<compile_context>
chip_gen: v7x
topology: tpu7x:2x2x1
jax: 0.10.0
libtpu: 0.0.40
codegen_flags: <defaults>
</compile_context>

<pallas_src>
import functools

import jax
import jax.numpy as jnp
from jax.experimental import pallas as pl
from jax.experimental.pallas import tpu as pltpu

EPS = 1e-5


# ------------------------------- the kernel -------------------------------

def _residual_block_kernel(x_ref, wb1_ref, g1_ref, be1_ref,
                           wb2_ref, g2_ref, be2_ref, fold_ref,
                           out_ref, xp_ref, *, N, H, W, C):
    """Whole residual block in one invocation (everything resident in VMEM).

    x_ref   : (N, H, W*C)          input rows, channels minor (lane-dense)
    wb*_ref : (3, (W+2)*C, W*C)    banded 3x3 conv weights, one band per dh
    g*/be*  : (1, W*C)             BN gamma / beta tiled across the W lane groups
    fold_ref: (W*C, W*C)           0/1 matrix summing lane groups per channel
    out_ref : (N, H, W*C)
    xp_ref  : (N, H+2, (W+2)*C)    scratch: zero halo + staged interior
    """
    M = N * H
    WC = W * C
    WpC = (W + 2) * C
    inv_m = 1.0 / (N * H * W)

    x = x_ref[...]                  # read the input once; reused for the residual
    fold = fold_ref[...]

    # Zero the (tiny) padded scratch once; the halo stays zero for both convs.
    xp_ref[...] = jnp.zeros(xp_ref.shape, xp_ref.dtype)
    xp_ref[:, 1:H + 1, C:C + WC] = x

    def conv_bn(wb, gamma, beta):
        # Banded row matmul grouped by dh: 3 MXU dots with K = (W+2)*C.
        y = None
        for dh in range(3):
            lhs = xp_ref[:, dh:dh + H, :].reshape(M, WpC)
            t = jnp.dot(lhs, wb[dh], preferred_element_type=jnp.float32)
            y = t if y is None else y + t                     # (M, W*C)

        # Single-pass batch statistics (sum / sum-of-squares).  The fold matmul
        # sums the per-w lane groups per channel and broadcasts the per-channel
        # totals back to every lane, keeping everything lane-dense.
        # TODO(synk): E[x^2]-E[x]^2 can cancel for large per-channel offsets;
        #             fine for this data, switch to a shifted form if needed.
        s = jnp.dot(jnp.sum(y, axis=0, keepdims=True), fold,
                    preferred_element_type=jnp.float32)
        ss = jnp.dot(jnp.sum(y * y, axis=0, keepdims=True), fold,
                     preferred_element_type=jnp.float32)
        mean = s * inv_m
        var = ss * inv_m - mean * mean
        scale = jax.lax.rsqrt(var + EPS) * gamma
        return (y - mean) * scale + beta

    # ---- conv1 (MXU) + bn1 + relu ------------------------------------------
    out1 = jnp.maximum(conv_bn(wb1_ref[...], g1_ref[...], be1_ref[...]), 0.0)

    # ---- reuse the same padded scratch for the intermediate (halo still 0) --
    xp_ref[:, 1:H + 1, C:C + WC] = out1.reshape(N, H, WC)

    # ---- conv2 (MXU) + bn2 + residual + relu --------------------------------
    out2 = conv_bn(wb2_ref[...], g2_ref[...], be2_ref[...])
    out_ref[...] = jnp.maximum(out2.reshape(N, H, WC) + x, 0.0)


# ------------------------------ python wrapper -----------------------------

def _banded_weight(w_oihw, W, C):
    """PyTorch (O, I, 3, 3) conv weight -> (3, (W+2)*C, W*C) banded row-matmul."""
    wt = jnp.transpose(w_oihw, (2, 3, 1, 0)).astype(jnp.float32)   # (dh, dw, ci, co)
    Wp = W + 2
    eye = jnp.eye(Wp, dtype=jnp.float32)
    bands = []
    for dh in range(3):
        acc = jnp.zeros((Wp, C, W, C), jnp.float32)
        for dw in range(3):
            sel = eye[:, dw:dw + W]                  # sel[wp, w] = [wp == w + dw]
            acc = acc + jnp.einsum('pw,io->piwo', sel, wt[dh, dw])
        bands.append(acc.reshape(Wp * C, W * C))
    return jnp.stack(bands, axis=0)                  # (3, (W+2)*C, W*C)


def residual_block_forward(x_nchw, params):
    """Runs the Pallas kernel.  x_nchw: (N, C, H, W) like PyTorch."""
    w1, b1, g1, be1, w2, b2, g2, be2 = params
    N, C, H, W = x_nchw.shape

    # Conv bias cancels exactly under training-mode (batch-stat) BatchNorm, so
    # it is not plumbed into the kernel.
    # TODO(synk): re-introduce the bias if switching to inference-mode BN
    #             (running statistics), where it no longer cancels.
    del b1, b2

    # NCHW -> lane-dense rows (N, H, W*C): boundary glue only, all math in-kernel.
    x_rows = jnp.transpose(x_nchw, (0, 2, 3, 1)).reshape(N, H, W * C).astype(jnp.float32)

    wb1 = _banded_weight(w1, W, C)
    wb2 = _banded_weight(w2, W, C)
    fold = jnp.tile(jnp.eye(C, dtype=jnp.float32), (W, W))          # (W*C, W*C)

    def tile_row(v):                                                 # (C,) -> (1, W*C)
        return jnp.tile(v.astype(jnp.float32), W).reshape(1, W * C)

    g1r, be1r, g2r, be2r = (tile_row(v) for v in (g1, be1, g2, be2))

    kernel = functools.partial(_residual_block_kernel, N=N, H=H, W=W, C=C)

    M, K, WC = N * H, (W + 2) * C, W * C
    cost = pl.CostEstimate(
        flops=2 * 3 * 2 * M * K * WC + 2 * 2 * 2 * WC * WC,          # conv dots + fold dots
        transcendentals=0,
        bytes_accessed=4 * (2 * M * WC + 2 * 3 * K * WC + WC * WC + 4 * WC),
    )

    out_rows = pl.pallas_call(
        kernel,
        out_shape=jax.ShapeDtypeStruct((N, H, W * C), jnp.float32),
        scratch_shapes=[pltpu.VMEM((N, H + 2, (W + 2) * C), jnp.float32)],
        cost_estimate=cost,
    )(x_rows, wb1, g1r, be1r, wb2, g2r, be2r, fold)

    out_nhwc = out_rows.reshape(N, H, W, C)
    return jnp.transpose(out_nhwc, (0, 3, 1, 2))                     # back to NCHW


# --------------------------- pure-JAX reference ----------------------------

def residual_block_reference(x_nchw, params):
    w1, b1, g1, be1, w2, b2, g2, be2 = params

    def conv(x, w, b):
        y = jax.lax.conv_general_dilated(
            x, w, window_strides=(1, 1), padding="SAME",
            dimension_numbers=("NCHW", "OIHW", "NCHW"))
        return y + b[None, :, None, None]

    def bn(y, g, be):
        mean = y.mean(axis=(0, 2, 3), keepdims=True)
        var = ((y - mean) ** 2).mean(axis=(0, 2, 3), keepdims=True)
        return ((y - mean) / jnp.sqrt(var + EPS)) * g[None, :, None, None] \
            + be[None, :, None, None]

    out = jax.nn.relu(bn(conv(x_nchw, w1, b1), g1, be1))
    out = bn(conv(out, w2, b2), g2, be2)
    return jax.nn.relu(out + x_nchw)


# ---------------------------------- main -----------------------------------

if __name__ == "__main__":
    N, C, H, W = 2, 4, 16, 16

    key = jax.random.PRNGKey(0)
    k_x, k_w1, k_b1, k_w2, k_b2 = jax.random.split(key, 5)

    x = jax.random.normal(k_x, (N, C, H, W), dtype=jnp.float32)

    # Deterministic synthetic parameters (shapes per nn.Conv2d / nn.BatchNorm2d).
    w1 = jax.random.normal(k_w1, (C, C, 3, 3), dtype=jnp.float32) * 0.2
    b1 = jax.random.normal(k_b1, (C,), dtype=jnp.float32) * 0.1
    w2 = jax.random.normal(k_w2, (C, C, 3, 3), dtype=jnp.float32) * 0.2
    b2 = jax.random.normal(k_b2, (C,), dtype=jnp.float32) * 0.1
    g1 = jnp.ones((C,), jnp.float32)    # BN affine defaults: gamma=1, beta=0
    be1 = jnp.zeros((C,), jnp.float32)
    g2 = jnp.ones((C,), jnp.float32)
    be2 = jnp.zeros((C,), jnp.float32)

    params = (w1, b1, g1, be1, w2, b2, g2, be2)

    out = residual_block_forward(x, params)
    out = jax.block_until_ready(out)

    ref = residual_block_reference(x, params)
    assert out.shape == (N, C, H, W)
    assert jnp.allclose(out, ref, rtol=1e-4, atol=1e-4), \
        f"max abs err = {float(jnp.max(jnp.abs(out - ref)))}"

    print("KERNEL_OK")
</pallas_src>

<mosaic_0001>
module attributes {stable_mosaic.version = 11 : i64} {
  func.func @_residual_block_kernel(%arg0: memref<2x16x64xf32, #tpu.memory_space<vmem>>, %arg1: memref<3x72x64xf32, #tpu.memory_space<vmem>>, %arg2: memref<1x64xf32, #tpu.memory_space<vmem>>, %arg3: memref<1x64xf32, #tpu.memory_space<vmem>>, %arg4: memref<3x72x64xf32, #tpu.memory_space<vmem>>, %arg5: memref<1x64xf32, #tpu.memory_space<vmem>>, %arg6: memref<1x64xf32, #tpu.memory_space<vmem>>, %arg7: memref<64x64xf32, #tpu.memory_space<vmem>>, %arg8: memref<2x16x64xf32, #tpu.memory_space<vmem>>, %arg9: memref<2x18x72xf32, #tpu.memory_space<vmem>>) attributes {dimension_semantics = [], scalar_prefetch = 0 : i64, scratch_operands = 1 : i64, tpu.core_type = #tpu.core_type<tc>} {
    %c0 = arith.constant 0 : index
    %c0_0 = arith.constant 0 : index
    %c0_1 = arith.constant 0 : index
    %0 = vector.load %arg0[%c0, %c0_0, %c0_1] : memref<2x16x64xf32, #tpu.memory_space<vmem>>, vector<2x16x64xf32>
    %c0_2 = arith.constant 0 : index
    %c0_3 = arith.constant 0 : index
    %1 = vector.load %arg7[%c0_2, %c0_3] : memref<64x64xf32, #tpu.memory_space<vmem>>, vector<64x64xf32>
    %cst = arith.constant 0.000000e+00 : f32
    %2 = vector.broadcast %cst : f32 to vector<2x18x72xf32>
    %c0_4 = arith.constant 0 : index
    %c0_5 = arith.constant 0 : index
    %c0_6 = arith.constant 0 : index
    %3 = vector.load %arg9[%c0_4, %c0_5, %c0_6] : memref<2x18x72xf32, #tpu.memory_space<vmem>>, vector<2x18x72xf32>
    tpu.vector_store %arg9[%c0_4, %c0_5, %c0_6], %2 {strides = array<i32>} : memref<2x18x72xf32, #tpu.memory_space<vmem>>, vector<2x18x72xf32>,
    %c0_7 = arith.constant 0 : index
    %c1 = arith.constant 1 : index
    %c4 = arith.constant 4 : index
    %4 = vector.load %arg9[%c0_7, %c1, %c4] : memref<2x18x72xf32, #tpu.memory_space<vmem>>, vector<2x16x64xf32>
    tpu.vector_store %arg9[%c0_7, %c1, %c4], %0 {strides = array<i32>} : memref<2x18x72xf32, #tpu.memory_space<vmem>>, vector<2x16x64xf32>,
    %c0_8 = arith.constant 0 : index
    %c0_9 = arith.constant 0 : index
    %c0_10 = arith.constant 0 : index
    %5 = vector.load %arg1[%c0_8, %c0_9, %c0_10] : memref<3x72x64xf32, #tpu.memory_space<vmem>>, vector<3x72x64xf32>
    %c0_11 = arith.constant 0 : index
    %c0_12 = arith.constant 0 : index
    %6 = vector.load %arg2[%c0_11, %c0_12] : memref<1x64xf32, #tpu.memory_space<vmem>>, vector<1x64xf32>
    %c0_13 = arith.constant 0 : index
    %c0_14 = arith.constant 0 : index
    %7 = vector.load %arg3[%c0_13, %c0_14] : memref<1x64xf32, #tpu.memory_space<vmem>>, vector<1x64xf32>
    %c0_15 = arith.constant 0 : index
    %c0_16 = arith.constant 0 : index
    %c0_17 = arith.constant 0 : index
    %8 = vector.load %arg9[%c0_15, %c0_16, %c0_17] : memref<2x18x72xf32, #tpu.memory_space<vmem>>, vector<2x16x72xf32>
    %9 = vector.shape_cast %8 : vector<2x16x72xf32> to vector<32x72xf32>
    %10 = vector.extract_strided_slice %5 {offsets = [0, 0, 0], sizes = [1, 72, 64], strides = [1, 1, 1]} : vector<3x72x64xf32> to vector<1x72x64xf32>
    %11 = vector.shape_cast %10 : vector<1x72x64xf32> to vector<72x64xf32>
    %cst_18 = arith.constant dense<0.000000e+00> : vector<32x64xf32>
    %12 = tpu.matmul %9, %11, %cst_18 {dimension_numbers = #tpu.dot_dimension_numbers<[1], [0], [0], [1], [0, 0, 1, 1], [], []>} : vector<32x72xf32>, vector<72x64xf32>, vector<32x64xf32> -> vector<32x64xf32>
    %c0_19 = arith.constant 0 : index
    %c1_20 = arith.constant 1 : index
    %c0_21 = arith.constant 0 : index
    %13 = vector.load %arg9[%c0_19, %c1_20, %c0_21] : memref<2x18x72xf32, #tpu.memory_space<vmem>>, vector<2x16x72xf32>
    %14 = vector.shape_cast %13 : vector<2x16x72xf32> to vector<32x72xf32>
    %15 = vector.extract_strided_slice %5 {offsets = [1, 0, 0], sizes = [1, 72, 64], strides = [1, 1, 1]} : vector<3x72x64xf32> to vector<1x72x64xf32>
    %16 = vector.shape_cast %15 : vector<1x72x64xf32> to vector<72x64xf32>
    %cst_22 = arith.constant dense<0.000000e+00> : vector<32x64xf32>
    %17 = tpu.matmul %14, %16, %cst_22 {dimension_numbers = #tpu.dot_dimension_numbers<[1], [0], [0], [1], [0, 0, 1, 1], [], []>} : vector<32x72xf32>, vector<72x64xf32>, vector<32x64xf32> -> vector<32x64xf32>
    %18 = arith.addf %12, %17 : vector<32x64xf32>
    %c0_23 = arith.constant 0 : index
    %c2 = arith.constant 2 : index
    %c0_24 = arith.constant 0 : index
    %19 = vector.load %arg9[%c0_23, %c2, %c0_24] : memref<2x18x72xf32, #tpu.memory_space<vmem>>, vector<2x16x72xf32>
    %20 = vector.shape_cast %19 : vector<2x16x72xf32> to vector<32x72xf32>
    %21 = vector.extract_strided_slice %5 {offsets = [2, 0, 0], sizes = [1, 72, 64], strides = [1, 1, 1]} : vector<3x72x64xf32> to vector<1x72x64xf32>
    %22 = vector.shape_cast %21 : vector<1x72x64xf32> to vector<72x64xf32>
    %cst_25 = arith.constant dense<0.000000e+00> : vector<32x64xf32>
    %23 = tpu.matmul %20, %22, %cst_25 {dimension_numbers = #tpu.dot_dimension_numbers<[1], [0], [0], [1], [0, 0, 1, 1], [], []>} : vector<32x72xf32>, vector<72x64xf32>, vector<32x64xf32> -> vector<32x64xf32>
    %24 = arith.addf %18, %23 : vector<32x64xf32>
    %cst_26 = arith.constant dense<0.000000e+00> : vector<64xf32>
    %25 = vector.multi_reduction <add>, %24, %cst_26 [0] : vector<32x64xf32> to vector<64xf32>
    %26 = vector.shape_cast %25 : vector<64xf32> to vector<1x64xf32>
    %cst_27 = arith.constant dense<0.000000e+00> : vector<1x64xf32>
    %27 = tpu.matmul %26, %1, %cst_27 {dimension_numbers = #tpu.dot_dimension_numbers<[1], [0], [0], [1], [0, 0, 1, 1], [], []>} : vector<1x64xf32>, vector<64x64xf32>, vector<1x64xf32> -> vector<1x64xf32>
    %28 = arith.mulf %24, %24 : vector<32x64xf32>
    %cst_28 = arith.constant dense<0.000000e+00> : vector<64xf32>
    %29 = vector.multi_reduction <add>, %28, %cst_28 [0] : vector<32x64xf32> to vector<64xf32>
    %30 = vector.shape_cast %29 : vector<64xf32> to vector<1x64xf32>
    %cst_29 = arith.constant dense<0.000000e+00> : vector<1x64xf32>
    %31 = tpu.matmul %30, %1, %cst_29 {dimension_numbers = #tpu.dot_dimension_numbers<[1], [0], [0], [1], [0, 0, 1, 1], [], []>} : vector<1x64xf32>, vector<64x64xf32>, vector<1x64xf32> -> vector<1x64xf32>
    %cst_30 = arith.constant 0.001953125 : f32
    %32 = vector.broadcast %cst_30 : f32 to vector<1x64xf32>
    %33 = arith.mulf %27, %32 : vector<1x64xf32>
    %cst_31 = arith.constant 0.001953125 : f32
    %34 = vector.broadcast %cst_31 : f32 to vector<1x64xf32>
    %35 = arith.mulf %31, %34 : vector<1x64xf32>
    %36 = arith.mulf %33, %33 : vector<1x64xf32>
    %37 = arith.subf %35, %36 : vector<1x64xf32>
    %cst_32 = arith.constant 9.99999974E-6 : f32
    %38 = vector.broadcast %cst_32 : f32 to vector<1x64xf32>
    %39 = arith.addf %37, %38 : vector<1x64xf32>
    %40 = math.rsqrt %39 : vector<1x64xf32>
    %41 = arith.mulf %40, %6 : vector<1x64xf32>
    %42 = vector.broadcast %33 : vector<1x64xf32> to vector<32x64xf32>
    %43 = arith.subf %24, %42 : vector<32x64xf32>
    %44 = vector.broadcast %41 : vector<1x64xf32> to vector<32x64xf32>
    %45 = arith.mulf %43, %44 : vector<32x64xf32>
    %46 = vector.broadcast %7 : vector<1x64xf32> to vector<32x64xf32>
    %47 = arith.addf %45, %46 : vector<32x64xf32>
    %cst_33 = arith.constant 0.000000e+00 : f32
    %48 = vector.broadcast %cst_33 : f32 to vector<32x64xf32>
    %49 = arith.maximumf %47, %48 : vector<32x64xf32>
    %50 = vector.shape_cast %49 : vector<32x64xf32> to vector<2x16x64xf32>
    %c0_34 = arith.constant 0 : index
    %c1_35 = arith.constant 1 : index
    %c4_36 = arith.constant 4 : index
    %51 = vector.load %arg9[%c0_34, %c1_35, %c4_36] : memref<2x18x72xf32, #tpu.memory_space<vmem>>, vector<2x16x64xf32>
    tpu.vector_store %arg9[%c0_34, %c1_35, %c4_36], %50 {strides = array<i32>} : memref<2x18x72xf32, #tpu.memory_space<vmem>>, vector<2x16x64xf32>,
    %c0_37 = arith.constant 0 : index
    %c0_38 = arith.constant 0 : index
    %c0_39 = arith.constant 0 : index
    %52 = vector.load %arg4[%c0_37, %c0_38, %c0_39] : memref<3x72x64xf32, #tpu.memory_space<vmem>>, vector<3x72x64xf32>
    %c0_40 = arith.constant 0 : index
    %c0_41 = arith.constant 0 : index
    %53 = vector.load %arg5[%c0_40, %c0_41] : memref<1x64xf32, #tpu.memory_space<vmem>>, vector<1x64xf32>
    %c0_42 = arith.constant 0 : index
    %c0_43 = arith.constant 0 : index
    %54 = vector.load %arg6[%c0_42, %c0_43] : memref<1x64xf32, #tpu.memory_space<vmem>>, vector<1x64xf32>
    %c0_44 = arith.constant 0 : index
    %c0_45 = arith.constant 0 : index
    %c0_46 = arith.constant 0 : index
    %55 = vector.load %arg9[%c0_44, %c0_45, %c0_46] : memref<2x18x72xf32, #tpu.memory_space<vmem>>, vector<2x16x72xf32>
    %56 = vector.shape_cast %55 : vector<2x16x72xf32> to vector<32x72xf32>
    %57 = vector.extract_strided_slice %52 {offsets = [0, 0, 0], sizes = [1, 72, 64], strides = [1, 1, 1]} : vector<3x72x64xf32> to vector<1x72x64xf32>
    %58 = vector.shape_cast %57 : vector<1x72x64xf32> to vector<72x64xf32>
    %cst_47 = arith.constant dense<0.000000e+00> : vector<32x64xf32>
    %59 = tpu.matmul %56, %58, %cst_47 {dimension_numbers = #tpu.dot_dimension_numbers<[1], [0], [0], [1], [0, 0, 1, 1], [], []>} : vector<32x72xf32>, vector<72x64xf32>, vector<32x64xf32> -> vector<32x64xf32>
    %c0_48 = arith.constant 0 : index
    %c1_49 = arith.constant 1 : index
    %c0_50 = arith.constant 0 : index
    %60 = vector.load %arg9[%c0_48, %c1_49, %c0_50] : memref<2x18x72xf32, #tpu.memory_space<vmem>>, vector<2x16x72xf32>
    %61 = vector.shape_cast %60 : vector<2x16x72xf32> to vector<32x72xf32>
    %62 = vector.extract_strided_slice %52 {offsets = [1, 0, 0], sizes = [1, 72, 64], strides = [1, 1, 1]} : vector<3x72x64xf32> to vector<1x72x64xf32>
    %63 = vector.shape_cast %62 : vector<1x72x64xf32> to vector<72x64xf32>
    %cst_51 = arith.constant dense<0.000000e+00> : vector<32x64xf32>
    %64 = tpu.matmul %61, %63, %cst_51 {dimension_numbers = #tpu.dot_dimension_numbers<[1], [0], [0], [1], [0, 0, 1, 1], [], []>} : vector<32x72xf32>, vector<72x64xf32>, vector<32x64xf32> -> vector<32x64xf32>
    %65 = arith.addf %59, %64 : vector<32x64xf32>
    %c0_52 = arith.constant 0 : index
    %c2_53 = arith.constant 2 : index
    %c0_54 = arith.constant 0 : index
    %66 = vector.load %arg9[%c0_52, %c2_53, %c0_54] : memref<2x18x72xf32, #tpu.memory_space<vmem>>, vector<2x16x72xf32>
    %67 = vector.shape_cast %66 : vector<2x16x72xf32> to vector<32x72xf32>
    %68 = vector.extract_strided_slice %52 {offsets = [2, 0, 0], sizes = [1, 72, 64], strides = [1, 1, 1]} : vector<3x72x64xf32> to vector<1x72x64xf32>
    %69 = vector.shape_cast %68 : vector<1x72x64xf32> to vector<72x64xf32>
    %cst_55 = arith.constant dense<0.000000e+00> : vector<32x64xf32>
    %70 = tpu.matmul %67, %69, %cst_55 {dimension_numbers = #tpu.dot_dimension_numbers<[1], [0], [0], [1], [0, 0, 1, 1], [], []>} : vector<32x72xf32>, vector<72x64xf32>, vector<32x64xf32> -> vector<32x64xf32>
    %71 = arith.addf %65, %70 : vector<32x64xf32>
    %cst_56 = arith.constant dense<0.000000e+00> : vector<64xf32>
    %72 = vector.multi_reduction <add>, %71, %cst_56 [0] : vector<32x64xf32> to vector<64xf32>
    %73 = vector.shape_cast %72 : vector<64xf32> to vector<1x64xf32>
    %cst_57 = arith.constant dense<0.000000e+00> : vector<1x64xf32>
    %74 = tpu.matmul %73, %1, %cst_57 {dimension_numbers = #tpu.dot_dimension_numbers<[1], [0], [0], [1], [0, 0, 1, 1], [], []>} : vector<1x64xf32>, vector<64x64xf32>, vector<1x64xf32> -> vector<1x64xf32>
    %75 = arith.mulf %71, %71 : vector<32x64xf32>
    %cst_58 = arith.constant dense<0.000000e+00> : vector<64xf32>
    %76 = vector.multi_reduction <add>, %75, %cst_58 [0] : vector<32x64xf32> to vector<64xf32>
    %77 = vector.shape_cast %76 : vector<64xf32> to vector<1x64xf32>
    %cst_59 = arith.constant dense<0.000000e+00> : vector<1x64xf32>
    %78 = tpu.matmul %77, %1, %cst_59 {dimension_numbers = #tpu.dot_dimension_numbers<[1], [0], [0], [1], [0, 0, 1, 1], [], []>} : vector<1x64xf32>, vector<64x64xf32>, vector<1x64xf32> -> vector<1x64xf32>
    %cst_60 = arith.constant 0.001953125 : f32
    %79 = vector.broadcast %cst_60 : f32 to vector<1x64xf32>
    %80 = arith.mulf %74, %79 : vector<1x64xf32>
    %cst_61 = arith.constant 0.001953125 : f32
    %81 = vector.broadcast %cst_61 : f32 to vector<1x64xf32>
    %82 = arith.mulf %78, %81 : vector<1x64xf32>
    %83 = arith.mulf %80, %80 : vector<1x64xf32>
    %84 = arith.subf %82, %83 : vector<1x64xf32>
    %cst_62 = arith.constant 9.99999974E-6 : f32
    %85 = vector.broadcast %cst_62 : f32 to vector<1x64xf32>
    %86 = arith.addf %84, %85 : vector<1x64xf32>
    %87 = math.rsqrt %86 : vector<1x64xf32>
    %88 = arith.mulf %87, %53 : vector<1x64xf32>
    %89 = vector.broadcast %80 : vector<1x64xf32> to vector<32x64xf32>
    %90 = arith.subf %71, %89 : vector<32x64xf32>
    %91 = vector.broadcast %88 : vector<1x64xf32> to vector<32x64xf32>
    %92 = arith.mulf %90, %91 : vector<32x64xf32>
    %93 = vector.broadcast %54 : vector<1x64xf32> to vector<32x64xf32>
    %94 = arith.addf %92, %93 : vector<32x64xf32>
    %95 = vector.shape_cast %94 : vector<32x64xf32> to vector<2x16x64xf32>
    %96 = arith.addf %95, %0 : vector<2x16x64xf32>
    %cst_63 = arith.constant 0.000000e+00 : f32
    %97 = vector.broadcast %cst_63 : f32 to vector<2x16x64xf32>
    %98 = arith.maximumf %96, %97 : vector<2x16x64xf32>
    %c0_64 = arith.constant 0 : index
    %c0_65 = arith.constant 0 : index
    %c0_66 = arith.constant 0 : index
    %99 = vector.load %arg8[%c0_64, %c0_65, %c0_66] : memref<2x16x64xf32, #tpu.memory_space<vmem>>, vector<2x16x64xf32>
    tpu.vector_store %arg8[%c0_64, %c0_65, %c0_66], %98 {strides = array<i32>} : memref<2x16x64xf32, #tpu.memory_space<vmem>>, vector<2x16x64xf32>,
    return
  }
}

</mosaic_0001>

<llo_original>
// kernel: tpu_custom_call.1
$region0: #{tpu_custom_call.1}
  #allocation0 [shape = 'u32[]', space=smem, size = 0x4, offset = 0x4, fixed_abs, tag = 'smem constant byte address 0x4 - core index']
  #allocation1 [shape = 'u32[144,128]{1,0:T(1,128)}', space=vmem, size = 0x12000, scoped, tag = 'internal scratch']
  #allocation2 [shape = 'f32[2,18,72]{2,1,0:T(8,128)}', space=vmem, size = 0x6000, scoped, tag = 'scratch operand']
  %s0 = inlined_call_operand.vmem [shape: f32[2,16,64], index: 0, kind: input, shape index: {}]
  %s1 = inlined_call_operand.vmem [shape: f32[3,72,64], index: 1, kind: input, shape index: {}]
  %s2 = inlined_call_operand.vmem [shape: f32[1,64], index: 2, kind: input, shape index: {}]
  %s3 = inlined_call_operand.vmem [shape: f32[1,64], index: 3, kind: input, shape index: {}]
  %s4 = inlined_call_operand.vmem [shape: f32[3,72,64], index: 4, kind: input, shape index: {}]
  %s5 = inlined_call_operand.vmem [shape: f32[1,64], index: 5, kind: input, shape index: {}]
  %s6 = inlined_call_operand.vmem [shape: f32[1,64], index: 6, kind: input, shape index: {}]
  %s7 = inlined_call_operand.vmem [shape: f32[64,64], index: 7, kind: input, shape index: {}]
  %s8 = inlined_call_operand.hbm [shape: f32[2,16,64], index: 8, kind: output, shape index: {}]
  %s9 = sld [smem:[#allocation0]]
  $region42: #{tpu_custom_call.1} parent=0
    _
  %s11 = ssub.s32 1, %s9
  %s12 = scalar_select 0, %s11, %s9
  $region1: #{tpu_custom_call.1} parent=0
    #allocation3 [shape = 'u8[16384]{0}', space=vmem, size = 0x4000, scoped, tag = 'output window, operand 0, single buffered']
    #allocation4 [shape = 's32[1]{0}', space=sflag, size = 0x4, scoped, tag = 'scoped memory for tpu_custom_call.1']
    %13 = vsyncpa [#allocation4], 0
    // Predicated region
    $region2: #{tpu_custom_call.1} parent=1 // pred_check
      _
    $region3: #{tpu_custom_call.1} parent=1 // pred_check_branch
      %15 = sbr.rel (0) target = $region5
    $region4: #{tpu_custom_call.1} parent=1 // pred_region
      _
    $region5: #{tpu_custom_call.1} parent=1 // pred_fallthru
      _
    // Predicated region
    $region6: #{tpu_custom_call.1} parent=1 // pred_check
      _
    $region7: #{tpu_custom_call.1} parent=1 // pred_check_branch
      %17 = sbr.rel (0) target = $region9
    $region8: #{tpu_custom_call.1} parent=1 // pred_region
      _
    $region9: #{tpu_custom_call.1} parent=1 // pred_fallthru
      _
    // Predicated region
    $region10: #{tpu_custom_call.1} parent=1 // pred_check
      _
    $region11: #{tpu_custom_call.1} parent=1 // pred_check_branch
      %19 = sbr.rel (0) target = $region13
    $region12: #{tpu_custom_call.1} parent=1 // pred_region
      _
    $region13: #{tpu_custom_call.1} parent=1 // pred_fallthru
      _
    // Predicated region
    $region14: #{tpu_custom_call.1} parent=1 // pred_check
      _
    $region15: #{tpu_custom_call.1} parent=1 // pred_check_branch
      %21 = sbr.rel (0) target = $region17
    $region16: #{tpu_custom_call.1} parent=1 // pred_region
      _
    $region17: #{tpu_custom_call.1} parent=1 // pred_fallthru
      _
    // Predicated region
    $region18: #{tpu_custom_call.1} parent=1 // pred_check
      _
    $region19: #{tpu_custom_call.1} parent=1 // pred_check_branch
      %23 = sbr.rel (0) target = $region21
    $region20: #{tpu_custom_call.1} parent=1 // pred_region
      _
    $region21: #{tpu_custom_call.1} parent=1 // pred_fallthru
      _
    // Predicated region
    $region22: #{tpu_custom_call.1} parent=1 // pred_check
      _
    $region23: #{tpu_custom_call.1} parent=1 // pred_check_branch
      %25 = sbr.rel (0) target = $region25
    $region24: #{tpu_custom_call.1} parent=1 // pred_region
      _
    $region25: #{tpu_custom_call.1} parent=1 // pred_fallthru
      _
    // Predicated region
    $region26: #{tpu_custom_call.1} parent=1 // pred_check
      _
    $region27: #{tpu_custom_call.1} parent=1 // pred_check_branch
      %27 = sbr.rel (0) target = $region29
    $region28: #{tpu_custom_call.1} parent=1 // pred_region
      _
    $region29: #{tpu_custom_call.1} parent=1 // pred_fallthru
      _
    // Predicated region
    $region30: #{tpu_custom_call.1} parent=1 // pred_check
      _
    $region31: #{tpu_custom_call.1} parent=1 // pred_check_branch
      %29 = sbr.rel (0) target = $region33
    $region32: #{tpu_custom_call.1} parent=1 // pred_region
      _
    $region33: #{tpu_custom_call.1} parent=1 // pred_fallthru
      _
    %v30 = vld [vmem:[%s0] sm:$0xff]
    %v31 = vld [vmem:[%s0 + $0x8] sm:$0xff]
    %v32 = vld [vmem:[%s0 + $0x10] sm:$0xff]
    %v33 = vld [vmem:[%s0 + $0x18] sm:$0xff]
    %v34 = vld [vmem:[%s7] sm:$0xff]
    %v35 = vld [vmem:[%s7 + $0x8] sm:$0xff]
    %v36 = vld [vmem:[%s7 + $0x10] sm:$0xff]
    %v37 = vld [vmem:[%s7 + $0x18] sm:$0xff]
    %v38 = vld [vmem:[%s7 + $0x20] sm:$0xff]
    %v39 = vld [vmem:[%s7 + $0x28] sm:$0xff]
    %v40 = vld [vmem:[%s7 + $0x30] sm:$0xff]
    %v41 = vld [vmem:[%s7 + $0x38] sm:$0xff]
    %vm42 = vcmask 588800
    %43 = vst.msk [vmem:[#allocation2] sm:$0xff] %vm42, 0.0
    %44 = vst.msk [vmem:[#allocation2 + $0x8] sm:$0xff] %vm42, 0.0
    %vm45 = vcmask 582656
    %46 = vst.msk [vmem:[#allocation2 + $0x10] sm:$0x3] %vm45, 0.0
    %47 = vst.msk [vmem:[#allocation2 + $0x18] sm:$0xff] %vm42, 0.0
    %48 = vst.msk [vmem:[#allocation2 + $0x20] sm:$0xff] %vm42, 0.0
    %49 = vst.msk [vmem:[#allocation2 + $0x28] sm:$0x3] %vm45, 0.0
    %54 = vrot.lane.b32.xlu0 %v30, 4
    %v55 = vpop.permute.xlu0 %54
    %56 = vrot.lane.b32.xlu0 %v31, 4
    %v57 = vpop.permute.xlu0 %56
    %58 = vrot.lane.b32.xlu0 %v32, 4
    %v59 = vpop.permute.xlu0 %58
    %60 = vrot.lane.b32.xlu0 %v33, 4
    %v61 = vpop.permute.xlu0 %60
    %vm66 = vcmask 556064
    %67 = vst.msk [vmem:[#allocation2 + $0x1] sm:$0xff] %vm66, %v55
    %68 = vst.msk [vmem:[#allocation2 + $0x9] sm:$0xff] %vm66, %v57
    %69 = vst.msk [vmem:[#allocation2 + $0x19] sm:$0xff] %vm66, %v59
    %70 = vst.msk [vmem:[#allocation2 + $0x21] sm:$0xff] %vm66, %v61
    %v71 = vld [vmem:[%s1] sm:$0xff]
    %v72 = vld [vmem:[%s1 + $0x8] sm:$0xff]
    %v73 = vld [vmem:[%s1 + $0x10] sm:$0xff]
    %v74 = vld [vmem:[%s1 + $0x18] sm:$0xff]
    %v75 = vld [vmem:[%s1 + $0x20] sm:$0xff]
    %v76 = vld [vmem:[%s1 + $0x28] sm:$0xff]
    %v77 = vld [vmem:[%s1 + $0x30] sm:$0xff]
    %v78 = vld [vmem:[%s1 + $0x38] sm:$0xff]
    %v79 = vld [vmem:[%s1 + $0x40] sm:$0xff]
    %v80 = vld [vmem:[%s1 + $0x48] sm:$0xff]
    %v81 = vld [vmem:[%s1 + $0x50] sm:$0xff]
    %v82 = vld [vmem:[%s1 + $0x58] sm:$0xff]
    %v83 = vld [vmem:[%s1 + $0x60] sm:$0xff]
    %v84 = vld [vmem:[%s1 + $0x68] sm:$0xff]
    %v85 = vld [vmem:[%s1 + $0x70] sm:$0xff]
    %v86 = vld [vmem:[%s1 + $0x78] sm:$0xff]
    %v87 = vld [vmem:[%s1 + $0x80] sm:$0xff]
    %v88 = vld [vmem:[%s1 + $0x88] sm:$0xff]
    %v89 = vld [vmem:[%s1 + $0x90] sm:$0xff]
    %v90 = vld [vmem:[%s1 + $0x98] sm:$0xff]
    %v91 = vld [vmem:[%s1 + $0xa0] sm:$0xff]
    %v92 = vld [vmem:[%s1 + $0xa8] sm:$0xff]
    %v93 = vld [vmem:[%s1 + $0xb0] sm:$0xff]
    %v94 = vld [vmem:[%s1 + $0xb8] sm:$0xff]
    %v95 = vld [vmem:[%s1 + $0xc0] sm:$0xff]
    %v96 = vld [vmem:[%s1 + $0xc8] sm:$0xff]
    %v97 = vld [vmem:[%s1 + $0xd0] sm:$0xff]
    %v98 = vld [vmem:[%s2] sm:$0x1]
    %v99 = vld [vmem:[%s3] sm:$0x1]
    %v100 = vld [vmem:[#allocation2] sm:$0xff]
    %v101 = vld [vmem:[#allocation2 + $0x8] sm:$0xff]
    %v102 = vld [vmem:[#allocation2 + $0x18] sm:$0xff]
    %v103 = vld [vmem:[#allocation2 + $0x20] sm:$0xff]
    %v104 = vld [vmem:[#allocation2 + $0x1] sm:$0xff]
    %v105 = vld [vmem:[#allocation2 + $0x9] sm:$0xff]
    %v106 = vld [vmem:[#allocation2 + $0x19] sm:$0xff]
    %v107 = vld [vmem:[#allocation2 + $0x21] sm:$0xff]
    %v109 = vsel %vm42, %v104, 0
    %v112 = vsel %vm42, %v105, 0
    %v115 = vsel %vm42, %v106, 0
    %v118 = vsel %vm42, %v107, 0
    %120 = vmatprep.subr.mxu0 0.0
    %121 = vmatpush1.msra.mxu0 %v80
    %122 = vmatprep.subr.mxu0 0.0
    %123 = vmatpush1.msra.mxu0 %v81
    %124 = vmatprep.subr.mxu0 0.0
    %125 = vmatpush1.msra.mxu0 %v82
    %126 = vmatprep.subr.mxu0 0.0
    %127 = vmatpush1.msra.mxu0 %v83
    %128 = vmatprep.subr.mxu0 0.0
    %129 = vmatpush1.msra.mxu0 %v84
    %130 = vmatprep.subr.mxu0 0.0
    %131 = vmatpush1.msra.mxu0 %v85
    %132 = vmatprep.subr.mxu0 0.0
    %133 = vmatpush1.msra.mxu0 %v86
    %134 = vmatprep.subr.mxu0 0.0
    %135 = vmatpush1.msra.mxu0 %v87
    %136 = vmatprep.subr.mxu0 0.0
    %137 = vmatpush1.msra.mxu0 %v88
    %138 = vmatprep.subr.mxu0 0.0
    %139 = vmatpush1.msra.mxu0 0.0
    %140 = vmatprep.subr.mxu0 0.0
    %141 = vmatpush1.msra.mxu0 0.0
    %142 = vmatprep.subr.mxu0 0.0
    %143 = vmatpush1.msra.mxu0 0.0
    %144 = vmatprep.subr.mxu0 0.0
    %145 = vmatpush1.msra.mxu0 0.0
    %146 = vmatprep.subr.mxu0 0.0
    %147 = vmatpush1.msra.mxu0 0.0
    %148 = vmatprep.subr.mxu0 0.0
    %149 = vmatpush1.msra.mxu0 0.0
    %150 = vmatprep.subr.mxu0 0.0
    %151 = vmatpush1.msra.mxu0 0.0
    %152 = vmatprep.subr.mxu0 0.0
    %153 = vmatpush1.msra.mxu0 0.0
    %154 = vmatprep.subr.mxu0 0.0
    %155 = vmatpush1.msra.mxu0 0.0
    %156 = vmatprep.subr.mxu0 0.0
    %157 = vmatpush1.msra.mxu0 0.0
    %158 = vmatprep.subr.mxu0 0.0
    %159 = vmatpush1.msra.mxu0 0.0
    %160 = vmatprep.subr.mxu0 0.0
    %161 = vmatpush1.msra.mxu0 0.0
    %162 = vmatprep.subr.mxu0 0.0
    %163 = vmatpush1.msra.mxu0 0.0
    %164 = vmatprep.subr.mxu0 0.0
    %165 = vmatpush1.msra.mxu0 0.0
    %166 = vmatprep.subr.mxu0 0.0
    %167 = vmatpush1.msra.mxu0 0.0
    %168 = vmatprep.subr.mxu0 0.0
    %169 = vmatpush1.msra.mxu0 0.0
    %170 = vmatprep.subr.mxu0 0.0
    %171 = vmatpush1.msra.mxu0 0.0
    %172 = vmatprep.subr.mxu0 0.0
    %173 = vmatpush1.msra.mxu0 0.0
    %174 = vmatprep.subr.mxu0 0.0
    %175 = vmatpush1.msra.mxu0 0.0
    %176 = vmatprep.subr.mxu0 0.0
    %177 = vmatpush1.msra.mxu0 0.0
    %178 = vmatprep.subr.mxu0 0.0
    %179 = vmatpush1.msra.mxu0 0.0
    %180 = vmatprep.subr.mxu0 0.0
    %181 = vmatpush1.msra.mxu0 0.0
    %182 = vmatprep.subr.mxu0 0.0
    %183 = vmatpush1.msra.mxu0 0.0
    %184 = vmatprep.mubr.f32.mxu0 0.0
    %185 = vmatmul.mubr.f32.gmra.mrb[0].mxu0 %v109
    %v186 = vpop.f32.mrb[0].mxu0
    %v187 = vadd.f32 0.0, %v186
    %v188 = vpop.f32.mrb[0].mxu0
    %189 = vmatprep.mubr.f32.mxu0 0.0
    %190 = vmatmul.mubr.f32.gmra.mrb[0].mxu0 %v112
    %v191 = vpop.f32.mrb[0].mxu0
    %v192 = vadd.f32 0.0, %v191
    %v193 = vpop.f32.mrb[0].mxu0
    %194 = vmatprep.mubr.f32.mxu0 0.0
    %195 = vmatmul.mubr.f32.gmra.mrb[0].mxu0 %v115
    %v196 = vpop.f32.mrb[0].mxu0
    %v197 = vadd.f32 0.0, %v196
    %v198 = vpop.f32.mrb[0].mxu0
    %199 = vmatprep.mubr.f32.mxu0 0.0
    %200 = vmatmul.mubr.f32.gmra.mrb[0].mxu0 %v118
    %v201 = vpop.f32.mrb[0].mxu0
    %v202 = vadd.f32 0.0, %v201
    %v203 = vpop.f32.mrb[0].mxu0
    %204 = vdwg.mxu0
    %v206 = vsel %vm42, %v100, 0
    %v209 = vsel %vm42, %v101, 0
    %v212 = vsel %vm42, %v102, 0
    %v215 = vsel %vm42, %v103, 0
    %217 = vmatprep.subr.mxu0 0.0
    %218 = vmatpush1.msra.mxu0 %v71
    %219 = vmatprep.subr.mxu0 0.0
    %220 = vmatpush1.msra.mxu0 %v72
    %221 = vmatprep.subr.mxu0 0.0
    %222 = vmatpush1.msra.mxu0 %v73
    %223 = vmatprep.subr.mxu0 0.0
    %224 = vmatpush1.msra.mxu0 %v74
    %225 = vmatprep.subr.mxu0 0.0
    %226 = vmatpush1.msra.mxu0 %v75
    %227 = vmatprep.subr.mxu0 0.0
    %228 = vmatpush1.msra.mxu0 %v76
    %229 = vmatprep.subr.mxu0 0.0
    %230 = vmatpush1.msra.mxu0 %v77
    %231 = vmatprep.subr.mxu0 0.0
    %232 = vmatpush1.msra.mxu0 %v78
    %233 = vmatprep.subr.mxu0 0.0
    %234 = vmatpush1.msra.mxu0 %v79
    %235 = vmatprep.subr.mxu0 0.0
    %236 = vmatpush1.msra.mxu0 0.0
    %237 = vmatprep.subr.mxu0 0.0
    %238 = vmatpush1.msra.mxu0 0.0
    %239 = vmatprep.subr.mxu0 0.0
    %240 = vmatpush1.msra.mxu0 0.0
    %241 = vmatprep.subr.mxu0 0.0
    %242 = vmatpush1.msra.mxu0 0.0
    %243 = vmatprep.subr.mxu0 0.0
    %244 = vmatpush1.msra.mxu0 0.0
    %245 = vmatprep.subr.mxu0 0.0
    %246 = vmatpush1.msra.mxu0 0.0
    %247 = vmatprep.subr.mxu0 0.0
    %248 = vmatpush1.msra.mxu0 0.0
    %249 = vmatprep.subr.mxu0 0.0
    %250 = vmatpush1.msra.mxu0 0.0
    %251 = vmatprep.subr.mxu0 0.0
    %252 = vmatpush1.msra.mxu0 0.0
    %253 = vmatprep.subr.mxu0 0.0
    %254 = vmatpush1.msra.mxu0 0.0
    %255 = vmatprep.subr.mxu0 0.0
    %256 = vmatpush1.msra.mxu0 0.0
    %257 = vmatprep.subr.mxu0 0.0
    %258 = vmatpush1.msra.mxu0 0.0
    %259 = vmatprep.subr.mxu0 0.0
    %260 = vmatpush1.msra.mxu0 0.0
    %261 = vmatprep.subr.mxu0 0.0
    %262 = vmatpush1.msra.mxu0 0.0
    %263 = vmatprep.subr.mxu0 0.0
    %264 = vmatpush1.msra.mxu0 0.0
    %265 = vmatprep.subr.mxu0 0.0
    %266 = vmatpush1.msra.mxu0 0.0
    %267 = vmatprep.subr.mxu0 0.0
    %268 = vmatpush1.msra.mxu0 0.0
    %269 = vmatprep.subr.mxu0 0.0
    %270 = vmatpush1.msra.mxu0 0.0
    %271 = vmatprep.subr.mxu0 0.0
    %272 = vmatpush1.msra.mxu0 0.0
    %273 = vmatprep.subr.mxu0 0.0
    %274 = vmatpush1.msra.mxu0 0.0
    %275 = vmatprep.subr.mxu0 0.0
    %276 = vmatpush1.msra.mxu0 0.0
    %277 = vmatprep.subr.mxu0 0.0
    %278 = vmatpush1.msra.mxu0 0.0
    %279 = vmatprep.subr.mxu0 0.0
    %280 = vmatpush1.msra.mxu0 0.0
    %281 = vmatprep.mubr.f32.mxu0 0.0
    %282 = vmatmul.mubr.f32.gmra.mrb[0].mxu0 %v206
    %v283 = vpop.f32.mrb[0].mxu0
    %v284 = vadd.f32 %v187, %v283
    %v285 = vpop.f32.mrb[0].mxu0
    %286 = vmatprep.mubr.f32.mxu0 0.0
    %287 = vmatmul.mubr.f32.gmra.mrb[0].mxu0 %v209
    %v288 = vpop.f32.mrb[0].mxu0
    %v289 = vadd.f32 %v192, %v288
    %v290 = vpop.f32.mrb[0].mxu0
    %291 = vmatprep.mubr.f32.mxu0 0.0
    %292 = vmatmul.mubr.f32.gmra.mrb[0].mxu0 %v212
    %v293 = vpop.f32.mrb[0].mxu0
    %v294 = vadd.f32 %v197, %v293
    %v295 = vpop.f32.mrb[0].mxu0
    %296 = vmatprep.mubr.f32.mxu0 0.0
    %297 = vmatmul.mubr.f32.gmra.mrb[0].mxu0 %v215
    %v298 = vpop.f32.mrb[0].mxu0
    %v299 = vadd.f32 %v202, %v298
    %v300 = vpop.f32.mrb[0].mxu0
    %301 = vdwg.mxu0
    %v302 = vld [vmem:[#allocation2 + $0x2] sm:$0xff]
    %v303 = vld [vmem:[#allocation2 + $0xa] sm:$0xff]
    %v304 = vld [vmem:[#allocation2 + $0x1a] sm:$0xff]
    %v305 = vld [vmem:[#allocation2 + $0x22] sm:$0xff]
    %v307 = vsel %vm42, %v302, 0
    %v310 = vsel %vm42, %v303, 0
    %v313 = vsel %vm42, %v304, 0
    %v316 = vsel %vm42, %v305, 0
    %318 = vmatprep.subr.mxu0 0.0
    %319 = vmatpush1.msra.mxu0 %v89
    %320 = vmatprep.subr.mxu0 0.0
    %321 = vmatpush1.msra.mxu0 %v90
    %322 = vmatprep.subr.mxu0 0.0
    %323 = vmatpush1.msra.mxu0 %v91
    %324 = vmatprep.subr.mxu0 0.0
    %325 = vmatpush1.msra.mxu0 %v92
    %326 = vmatprep.subr.mxu0 0.0
    %327 = vmatpush1.msra.mxu0 %v93
    %328 = vmatprep.subr.mxu0 0.0
    %329 = vmatpush1.msra.mxu0 %v94
    %330 = vmatprep.subr.mxu0 0.0
    %331 = vmatpush1.msra.mxu0 %v95
    %332 = vmatprep.subr.mxu0 0.0
    %333 = vmatpush1.msra.mxu0 %v96
    %334 = vmatprep.subr.mxu0 0.0
    %335 = vmatpush1.msra.mxu0 %v97
    %336 = vmatprep.subr.mxu0 0.0
    %337 = vmatpush1.msra.mxu0 0.0
    %338 = vmatprep.subr.mxu0 0.0
    %339 = vmatpush1.msra.mxu0 0.0
    %340 = vmatprep.subr.mxu0 0.0
    %341 = vmatpush1.msra.mxu0 0.0
    %342 = vmatprep.subr.mxu0 0.0
    %343 = vmatpush1.msra.mxu0 0.0
    %344 = vmatprep.subr.mxu0 0.0
    %345 = vmatpush1.msra.mxu0 0.0
    %346 = vmatprep.subr.mxu0 0.0
    %347 = vmatpush1.msra.mxu0 0.0
    %348 = vmatprep.subr.mxu0 0.0
    %349 = vmatpush1.msra.mxu0 0.0
    %350 = vmatprep.subr.mxu0 0.0
    %351 = vmatpush1.msra.mxu0 0.0
    %352 = vmatprep.subr.mxu0 0.0
    %353 = vmatpush1.msra.mxu0 0.0
    %354 = vmatprep.subr.mxu0 0.0
    %355 = vmatpush1.msra.mxu0 0.0
    %356 = vmatprep.subr.mxu0 0.0
    %357 = vmatpush1.msra.mxu0 0.0
    %358 = vmatprep.subr.mxu0 0.0
    %359 = vmatpush1.msra.mxu0 0.0
    %360 = vmatprep.subr.mxu0 0.0
    %361 = vmatpush1.msra.mxu0 0.0
    %362 = vmatprep.subr.mxu0 0.0
    %363 = vmatpush1.msra.mxu0 0.0
    %364 = vmatprep.subr.mxu0 0.0
    %365 = vmatpush1.msra.mxu0 0.0
    %366 = vmatprep.subr.mxu0 0.0
    %367 = vmatpush1.msra.mxu0 0.0
    %368 = vmatprep.subr.mxu0 0.0
    %369 = vmatpush1.msra.mxu0 0.0
    %370 = vmatprep.subr.mxu0 0.0
    %371 = vmatpush1.msra.mxu0 0.0
    %372 = vmatprep.subr.mxu0 0.0
    %373 = vmatpush1.msra.mxu0 0.0
    %374 = vmatprep.subr.mxu0 0.0
    %375 = vmatpush1.msra.mxu0 0.0
    %376 = vmatprep.subr.mxu0 0.0
    %377 = vmatpush1.msra.mxu0 0.0
    %378 = vmatprep.subr.mxu0 0.0
    %379 = vmatpush1.msra.mxu0 0.0
    %380 = vmatprep.subr.mxu0 0.0
    %381 = vmatpush1.msra.mxu0 0.0
    %382 = vmatprep.mubr.f32.mxu0 0.0
    %383 = vmatmul.mubr.f32.gmra.mrb[0].mxu0 %v307
    %v384 = vpop.f32.mrb[0].mxu0
    %v385 = vadd.f32 0.0, %v384
    %v386 = vpop.f32.mrb[0].mxu0
    %387 = vmatprep.mubr.f32.mxu0 0.0
    %388 = vmatmul.mubr.f32.gmra.mrb[0].mxu0 %v310
    %v389 = vpop.f32.mrb[0].mxu0
    %v390 = vadd.f32 0.0, %v389
    %v391 = vpop.f32.mrb[0].mxu0
    %392 = vmatprep.mubr.f32.mxu0 0.0
    %393 = vmatmul.mubr.f32.gmra.mrb[0].mxu0 %v313
    %v394 = vpop.f32.mrb[0].mxu0
    %v395 = vadd.f32 0.0, %v394
    %v396 = vpop.f32.mrb[0].mxu0
    %397 = vmatprep.mubr.f32.mxu0 0.0
    %398 = vmatmul.mubr.f32.gmra.mrb[0].mxu0 %v316
    %v399 = vpop.f32.mrb[0].mxu0
    %v400 = vadd.f32 0.0, %v399
    %v401 = vpop.f32.mrb[0].mxu0
    %402 = vdwg.mxu0
    %v403 = vadd.f32 %v284, %v385
    %v404 = vadd.f32 %v289, %v390
    %v405 = vadd.f32 %v294, %v395
    %v406 = vadd.f32 %v299, %v400
    %vm407 = vcmask 523264
    %v408 = vsel %vm407, %v403, 0.0
    %v409 = vsel %vm407, %v404, 0.0
    %v410 = vadd.f32 %v408, %v409
    %v411 = vsel %vm407, %v405, 0.0
    %v412 = vadd.f32 %v410, %v411
    %v413 = vsel %vm407, %v406, 0.0
    %v414 = vadd.f32 %v412, %v413
    %v415 = vrot.slane %v414, 4
    %v416 = vadd.f32 %v414, %v415
    %v417 = vrot.slane %v416, 2
    %v418 = vadd.f32 %v416, %v417
    %v419 = vrot.slane %v418, 1
    %v420 = vadd.f32 %v418, %v419
    %v422 = vsel %vm407, %v420, 0
    %424 = vmatprep.subr.mxu0 0.0
    %425 = vmatpush1.msra.mxu0 %v34
    %426 = vmatprep.subr.mxu0 0.0
    %427 = vmatpush1.msra.mxu0 %v35
    %428 = vmatprep.subr.mxu0 0.0
    %429 = vmatpush1.msra.mxu0 %v36
    %430 = vmatprep.subr.mxu0 0.0
    %431 = vmatpush1.msra.mxu0 %v37
    %432 = vmatprep.subr.mxu0 0.0
    %433 = vmatpush1.msra.mxu0 %v38
    %434 = vmatprep.subr.mxu0 0.0
    %435 = vmatpush1.msra.mxu0 %v39
    %436 = vmatprep.subr.mxu0 0.0
    %437 = vmatpush1.msra.mxu0 %v40
    %438 = vmatprep.subr.mxu0 0.0
    %439 = vmatpush1.msra.mxu0 %v41
    %440 = vmatprep.subr.mxu0 0.0
    %441 = vmatpush1.msra.mxu0 0.0
    %442 = vmatprep.subr.mxu0 0.0
    %443 = vmatpush1.msra.mxu0 0.0
    %444 = vmatprep.subr.mxu0 0.0
    %445 = vmatpush1.msra.mxu0 0.0
    %446 = vmatprep.subr.mxu0 0.0
    %447 = vmatpush1.msra.mxu0 0.0
    %448 = vmatprep.subr.mxu0 0.0
    %449 = vmatpush1.msra.mxu0 0.0
    %450 = vmatprep.subr.mxu0 0.0
    %451 = vmatpush1.msra.mxu0 0.0
    %452 = vmatprep.subr.mxu0 0.0
    %453 = vmatpush1.msra.mxu0 0.0
    %454 = vmatprep.subr.mxu0 0.0
    %455 = vmatpush1.msra.mxu0 0.0
    %456 = vmatprep.subr.mxu0 0.0
    %457 = vmatpush1.msra.mxu0 0.0
    %458 = vmatprep.subr.mxu0 0.0
    %459 = vmatpush1.msra.mxu0 0.0
    %460 = vmatprep.subr.mxu0 0.0
    %461 = vmatpush1.msra.mxu0 0.0
    %462 = vmatprep.subr.mxu0 0.0
    %463 = vmatpush1.msra.mxu0 0.0
    %464 = vmatprep.subr.mxu0 0.0
    %465 = vmatpush1.msra.mxu0 0.0
    %466 = vmatprep.subr.mxu0 0.0
    %467 = vmatpush1.msra.mxu0 0.0
    %468 = vmatprep.subr.mxu0 0.0
    %469 = vmatpush1.msra.mxu0 0.0
    %470 = vmatprep.subr.mxu0 0.0
    %471 = vmatpush1.msra.mxu0 0.0
    %472 = vmatprep.subr.mxu0 0.0
    %473 = vmatpush1.msra.mxu0 0.0
    %474 = vmatprep.subr.mxu0 0.0
    %475 = vmatpush1.msra.mxu0 0.0
    %476 = vmatprep.subr.mxu0 0.0
    %477 = vmatpush1.msra.mxu0 0.0
    %478 = vmatprep.subr.mxu0 0.0
    %479 = vmatpush1.msra.mxu0 0.0
    %480 = vmatprep.subr.mxu0 0.0
    %481 = vmatpush1.msra.mxu0 0.0
    %482 = vmatprep.subr.mxu0 0.0
    %483 = vmatpush1.msra.mxu0 0.0
    %484 = vmatprep.subr.mxu0 0.0
    %485 = vmatpush1.msra.mxu0 0.0
    %486 = vmatprep.subr.mxu0 0.0
    %487 = vmatpush1.msra.mxu0 0.0
    %488 = vmatprep.mubr.f32.mxu0 0.0
    %489 = vmatmul.mubr.f32.gmra.mrb[0].mxu0 %v422
    %v490 = vpop.f32.mrb[0].mxu0
    %v491 = vadd.f32 0.0, %v490
    %v492 = vpop.f32.mrb[0].mxu0
    %493 = vdwg.mxu0
    %v494 = vmul.f32 %v403, %v403
    %v495 = vmul.f32 %v404, %v404
    %v496 = vmul.f32 %v405, %v405
    %v497 = vmul.f32 %v406, %v406
    %v498 = vsel %vm407, %v494, 0.0
    %v499 = vsel %vm407, %v495, 0.0
    %v500 = vadd.f32 %v498, %v499
    %v501 = vsel %vm407, %v496, 0.0
    %v502 = vadd.f32 %v500, %v501
    %v503 = vsel %vm407, %v497, 0.0
    %v504 = vadd.f32 %v502, %v503
    %v505 = vrot.slane %v504, 4
    %v506 = vadd.f32 %v504, %v505
    %v507 = vrot.slane %v506, 2
    %v508 = vadd.f32 %v506, %v507
    %v509 = vrot.slane %v508, 1
    %v510 = vadd.f32 %v508, %v509
    %v512 = vsel %vm407, %v510, 0
    %514 = vmatprep.subr.mxu0 0.0
    %515 = vmatpush1.msra.mxu0 %v34
    %516 = vmatprep.subr.mxu0 0.0
    %517 = vmatpush1.msra.mxu0 %v35
    %518 = vmatprep.subr.mxu0 0.0
    %519 = vmatpush1.msra.mxu0 %v36
    %520 = vmatprep.subr.mxu0 0.0
    %521 = vmatpush1.msra.mxu0 %v37
    %522 = vmatprep.subr.mxu0 0.0
    %523 = vmatpush1.msra.mxu0 %v38
    %524 = vmatprep.subr.mxu0 0.0
    %525 = vmatpush1.msra.mxu0 %v39
    %526 = vmatprep.subr.mxu0 0.0
    %527 = vmatpush1.msra.mxu0 %v40
    %528 = vmatprep.subr.mxu0 0.0
    %529 = vmatpush1.msra.mxu0 %v41
    %530 = vmatprep.subr.mxu0 0.0
    %531 = vmatpush1.msra.mxu0 0.0
    %532 = vmatprep.subr.mxu0 0.0
    %533 = vmatpush1.msra.mxu0 0.0
    %534 = vmatprep.subr.mxu0 0.0
    %535 = vmatpush1.msra.mxu0 0.0
    %536 = vmatprep.subr.mxu0 0.0
    %537 = vmatpush1.msra.mxu0 0.0
    %538 = vmatprep.subr.mxu0 0.0
    %539 = vmatpush1.msra.mxu0 0.0
    %540 = vmatprep.subr.mxu0 0.0
    %541 = vmatpush1.msra.mxu0 0.0
    %542 = vmatprep.subr.mxu0 0.0
    %543 = vmatpush1.msra.mxu0 0.0
    %544 = vmatprep.subr.mxu0 0.0
    %545 = vmatpush1.msra.mxu0 0.0
    %546 = vmatprep.subr.mxu0 0.0
    %547 = vmatpush1.msra.mxu0 0.0
    %548 = vmatprep.subr.mxu0 0.0
    %549 = vmatpush1.msra.mxu0 0.0
    %550 = vmatprep.subr.mxu0 0.0
    %551 = vmatpush1.msra.mxu0 0.0
    %552 = vmatprep.subr.mxu0 0.0
    %553 = vmatpush1.msra.mxu0 0.0
    %554 = vmatprep.subr.mxu0 0.0
    %555 = vmatpush1.msra.mxu0 0.0
    %556 = vmatprep.subr.mxu0 0.0
    %557 = vmatpush1.msra.mxu0 0.0
    %558 = vmatprep.subr.mxu0 0.0
    %559 = vmatpush1.msra.mxu0 0.0
    %560 = vmatprep.subr.mxu0 0.0
    %561 = vmatpush1.msra.mxu0 0.0
    %562 = vmatprep.subr.mxu0 0.0
    %563 = vmatpush1.msra.mxu0 0.0
    %564 = vmatprep.subr.mxu0 0.0
    %565 = vmatpush1.msra.mxu0 0.0
    %566 = vmatprep.subr.mxu0 0.0
    %567 = vmatpush1.msra.mxu0 0.0
    %568 = vmatprep.subr.mxu0 0.0
    %569 = vmatpush1.msra.mxu0 0.0
    %570 = vmatprep.subr.mxu0 0.0
    %571 = vmatpush1.msra.mxu0 0.0
    %572 = vmatprep.subr.mxu0 0.0
    %573 = vmatpush1.msra.mxu0 0.0
    %574 = vmatprep.subr.mxu0 0.0
    %575 = vmatpush1.msra.mxu0 0.0
    %576 = vmatprep.subr.mxu0 0.0
    %577 = vmatpush1.msra.mxu0 0.0
    %578 = vmatprep.mubr.f32.mxu0 0.0
    %579 = vmatmul.mubr.f32.gmra.mrb[0].mxu0 %v512
    %v580 = vpop.f32.mrb[0].mxu0
    %v581 = vadd.f32 0.0, %v580
    %v582 = vpop.f32.mrb[0].mxu0
    %583 = vdwg.mxu0
    %v584 = vmul.f32 %v491, 0.001953125
    %v585 = vmul.f32 %v581, 0.001953125
    %v586 = vmul.f32 %v584, %v584
    %v587 = vsub.f32 %v585, %v586
    %v588 = vadd.f32 %v587, 1e-05
    %v589 = vrsqrt.pop %v588
    %v590 = vmul.f32 %v589, %v98
    %v591 = vlaneseq
    %v592 = vshrl.u32 %v591, 7
    %v593 = vsub.s32 0, %v592
    %v594 = vrot.slane %v584, %v593
    %v595 = vsub.f32 %v403, %v594
    %v596 = vsub.f32 %v404, %v594
    %v597 = vsub.f32 %v405, %v594
    %v598 = vsub.f32 %v406, %v594
    %v599 = vlaneseq
    %v600 = vshrl.u32 %v599, 7
    %v601 = vsub.s32 0, %v600
    %v602 = vrot.slane %v590, %v601
    %v603 = vmul.f32 %v595, %v602
    %v604 = vmul.f32 %v596, %v602
    %v605 = vmul.f32 %v597, %v602
    %v606 = vmul.f32 %v598, %v602
    %v608 = vlaneseq
    %v609 = vshrl.u32 %v608, 7
    %v610 = vsub.s32 0, %v609
    %v611 = vrot.slane %v99, %v610
    %v613 = vadd.f32 %v603, %v611
    %v614 = vadd.f32 %v604, %v611
    %v615 = vadd.f32 %v605, %v611
    %v616 = vadd.f32 %v606, %v611
    %v617 = vmax.f32 %v613, 0.0
    %v618 = vmax.f32 %v614, 0.0
    %v619 = vmax.f32 %v615, 0.0
    %v620 = vmax.f32 %v616, 0.0
    %625 = vrot.lane.b32.xlu0 %v617, 4
    %v626 = vpop.permute.xlu0 %625
    %627 = vrot.lane.b32.xlu0 %v618, 4
    %v628 = vpop.permute.xlu0 %627
    %629 = vrot.lane.b32.xlu0 %v619, 4
    %v630 = vpop.permute.xlu0 %629
    %631 = vrot.lane.b32.xlu0 %v620, 4
    %v632 = vpop.permute.xlu0 %631
    %637 = vst.msk [vmem:[#allocation2 + $0x1] sm:$0xff] %vm66, %v626
    %638 = vst.msk [vmem:[#allocation2 + $0x9] sm:$0xff] %vm66, %v628
    %639 = vst.msk [vmem:[#allocation2 + $0x19] sm:$0xff] %vm66, %v630
    %640 = vst.msk [vmem:[#allocation2 + $0x21] sm:$0xff] %vm66, %v632
    %v641 = vld [vmem:[%s4] sm:$0xff]
    %v642 = vld [vmem:[%s4 + $0x8] sm:$0xff]
    %v643 = vld [vmem:[%s4 + $0x10] sm:$0xff]
    %v644 = vld [vmem:[%s4 + $0x18] sm:$0xff]
    %v645 = vld [vmem:[%s4 + $0x20] sm:$0xff]
    %v646 = vld [vmem:[%s4 + $0x28] sm:$0xff]
    %v647 = vld [vmem:[%s4 + $0x30] sm:$0xff]
    %v648 = vld [vmem:[%s4 + $0x38] sm:$0xff]
    %v649 = vld [vmem:[%s4 + $0x40] sm:$0xff]
    %v650 = vld [vmem:[%s4 + $0x48] sm:$0xff]
    %v651 = vld [vmem:[%s4 + $0x50] sm:$0xff]
    %v652 = vld [vmem:[%s4 + $0x58] sm:$0xff]
    %v653 = vld [vmem:[%s4 + $0x60] sm:$0xff]
    %v654 = vld [vmem:[%s4 + $0x68] sm:$0xff]
    %v655 = vld [vmem:[%s4 + $0x70] sm:$0xff]
    %v656 = vld [vmem:[%s4 + $0x78] sm:$0xff]
    %v657 = vld [vmem:[%s4 + $0x80] sm:$0xff]
    %v658 = vld [vmem:[%s4 + $0x88] sm:$0xff]
    %v659 = vld [vmem:[%s4 + $0x90] sm:$0xff]
    %v660 = vld [vmem:[%s4 + $0x98] sm:$0xff]
    %v661 = vld [vmem:[%s4 + $0xa0] sm:$0xff]
    %v662 = vld [vmem:[%s4 + $0xa8] sm:$0xff]
    %v663 = vld [vmem:[%s4 + $0xb0] sm:$0xff]
    %v664 = vld [vmem:[%s4 + $0xb8] sm:$0xff]
    %v665 = vld [vmem:[%s4 + $0xc0] sm:$0xff]
    %v666 = vld [vmem:[%s4 + $0xc8] sm:$0xff]
    %v667 = vld [vmem:[%s4 + $0xd0] sm:$0xff]
    %v668 = vld [vmem:[%s5] sm:$0x1]
    %v669 = vld [vmem:[%s6] sm:$0x1]
    %v670 = vld [vmem:[#allocation2] sm:$0xff]
    %v671 = vld [vmem:[#allocation2 + $0x8] sm:$0xff]
    %v672 = vld [vmem:[#allocation2 + $0x18] sm:$0xff]
    %v673 = vld [vmem:[#allocation2 + $0x20] sm:$0xff]
    %v674 = vld [vmem:[#allocation2 + $0x1] sm:$0xff]
    %v675 = vld [vmem:[#allocation2 + $0x9] sm:$0xff]
    %v676 = vld [vmem:[#allocation2 + $0x19] sm:$0xff]
    %v677 = vld [vmem:[#allocation2 + $0x21] sm:$0xff]
    %v679 = vsel %vm42, %v674, 0
    %v682 = vsel %vm42, %v675, 0
    %v685 = vsel %vm42, %v676, 0
    %v688 = vsel %vm42, %v677, 0
    %690 = vmatprep.subr.mxu0 0.0
    %691 = vmatpush1.msra.mxu0 %v650
    %692 = vmatprep.subr.mxu0 0.0
    %693 = vmatpush1.msra.mxu0 %v651
    %694 = vmatprep.subr.mxu0 0.0
    %695 = vmatpush1.msra.mxu0 %v652
    %696 = vmatprep.subr.mxu0 0.0
    %697 = vmatpush1.msra.mxu0 %v653
    %698 = vmatprep.subr.mxu0 0.0
    %699 = vmatpush1.msra.mxu0 %v654
    %700 = vmatprep.subr.mxu0 0.0
    %701 = vmatpush1.msra.mxu0 %v655
    %702 = vmatprep.subr.mxu0 0.0
    %703 = vmatpush1.msra.mxu0 %v656
    %704 = vmatprep.subr.mxu0 0.0
    %705 = vmatpush1.msra.mxu0 %v657
    %706 = vmatprep.subr.mxu0 0.0
    %707 = vmatpush1.msra.mxu0 %v658
    %708 = vmatprep.subr.mxu0 0.0
    %709 = vmatpush1.msra.mxu0 0.0
    %710 = vmatprep.subr.mxu0 0.0
    %711 = vmatpush1.msra.mxu0 0.0
    %712 = vmatprep.subr.mxu0 0.0
    %713 = vmatpush1.msra.mxu0 0.0
    %714 = vmatprep.subr.mxu0 0.0
    %715 = vmatpush1.msra.mxu0 0.0
    %716 = vmatprep.subr.mxu0 0.0
    %717 = vmatpush1.msra.mxu0 0.0
    %718 = vmatprep.subr.mxu0 0.0
    %719 = vmatpush1.msra.mxu0 0.0
    %720 = vmatprep.subr.mxu0 0.0
    %721 = vmatpush1.msra.mxu0 0.0
    %722 = vmatprep.subr.mxu0 0.0
    %723 = vmatpush1.msra.mxu0 0.0
    %724 = vmatprep.subr.mxu0 0.0
    %725 = vmatpush1.msra.mxu0 0.0
    %726 = vmatprep.subr.mxu0 0.0
    %727 = vmatpush1.msra.mxu0 0.0
    %728 = vmatprep.subr.mxu0 0.0
    %729 = vmatpush1.msra.mxu0 0.0
    %730 = vmatprep.subr.mxu0 0.0
    %731 = vmatpush1.msra.mxu0 0.0
    %732 = vmatprep.subr.mxu0 0.0
    %733 = vmatpush1.msra.mxu0 0.0
    %734 = vmatprep.subr.mxu0 0.0
    %735 = vmatpush1.msra.mxu0 0.0
    %736 = vmatprep.subr.mxu0 0.0
    %737 = vmatpush1.msra.mxu0 0.0
    %738 = vmatprep.subr.mxu0 0.0
    %739 = vmatpush1.msra.mxu0 0.0
    %740 = vmatprep.subr.mxu0 0.0
    %741 = vmatpush1.msra.mxu0 0.0
    %742 = vmatprep.subr.mxu0 0.0
    %743 = vmatpush1.msra.mxu0 0.0
    %744 = vmatprep.subr.mxu0 0.0
    %745 = vmatpush1.msra.mxu0 0.0
    %746 = vmatprep.subr.mxu0 0.0
    %747 = vmatpush1.msra.mxu0 0.0
    %748 = vmatprep.subr.mxu0 0.0
    %749 = vmatpush1.msra.mxu0 0.0
    %750 = vmatprep.subr.mxu0 0.0
    %751 = vmatpush1.msra.mxu0 0.0
    %752 = vmatprep.subr.mxu0 0.0
    %753 = vmatpush1.msra.mxu0 0.0
    %754 = vmatprep.mubr.f32.mxu0 0.0
    %755 = vmatmul.mubr.f32.gmra.mrb[0].mxu0 %v679
    %v756 = vpop.f32.mrb[0].mxu0
    %v757 = vadd.f32 0.0, %v756
    %v758 = vpop.f32.mrb[0].mxu0
    %759 = vmatprep.mubr.f32.mxu0 0.0
    %760 = vmatmul.mubr.f32.gmra.mrb[0].mxu0 %v682
    %v761 = vpop.f32.mrb[0].mxu0
    %v762 = vadd.f32 0.0, %v761
    %v763 = vpop.f32.mrb[0].mxu0
    %764 = vmatprep.mubr.f32.mxu0 0.0
    %765 = vmatmul.mubr.f32.gmra.mrb[0].mxu0 %v685
    %v766 = vpop.f32.mrb[0].mxu0
    %v767 = vadd.f32 0.0, %v766
    %v768 = vpop.f32.mrb[0].mxu0
    %769 = vmatprep.mubr.f32.mxu0 0.0
    %770 = vmatmul.mubr.f32.gmra.mrb[0].mxu0 %v688
    %v771 = vpop.f32.mrb[0].mxu0
    %v772 = vadd.f32 0.0, %v771
    %v773 = vpop.f32.mrb[0].mxu0
    %774 = vdwg.mxu0
    %v776 = vsel %vm42, %v670, 0
    %v779 = vsel %vm42, %v671, 0
    %v782 = vsel %vm42, %v672, 0
    %v785 = vsel %vm42, %v673, 0
    %787 = vmatprep.subr.mxu0 0.0
    %788 = vmatpush1.msra.mxu0 %v641
    %789 = vmatprep.subr.mxu0 0.0
    %790 = vmatpush1.msra.mxu0 %v642
    %791 = vmatprep.subr.mxu0 0.0
    %792 = vmatpush1.msra.mxu0 %v643
    %793 = vmatprep.subr.mxu0 0.0
    %794 = vmatpush1.msra.mxu0 %v644
    %795 = vmatprep.subr.mxu0 0.0
    %796 = vmatpush1.msra.mxu0 %v645
    %797 = vmatprep.subr.mxu0 0.0
    %798 = vmatpush1.msra.mxu0 %v646
    %799 = vmatprep.subr.mxu0 0.0
    %800 = vmatpush1.msra.mxu0 %v647
    %801 = vmatprep.subr.mxu0 0.0
    %802 = vmatpush1.msra.mxu0 %v648
    %803 = vmatprep.subr.mxu0 0.0
    %804 = vmatpush1.msra.mxu0 %v649
    %805 = vmatprep.subr.mxu0 0.0
    %806 = vmatpush1.msra.mxu0 0.0
    %807 = vmatprep.subr.mxu0 0.0
    %808 = vmatpush1.msra.mxu0 0.0
    %809 = vmatprep.subr.mxu0 0.0
    %810 = vmatpush1.msra.mxu0 0.0
    %811 = vmatprep.subr.mxu0 0.0
    %812 = vmatpush1.msra.mxu0 0.0
    %813 = vmatprep.subr.mxu0 0.0
    %814 = vmatpush1.msra.mxu0 0.0
    %815 = vmatprep.subr.mxu0 0.0
    %816 = vmatpush1.msra.mxu0 0.0
    %817 = vmatprep.subr.mxu0 0.0
    %818 = vmatpush1.msra.mxu0 0.0
    %819 = vmatprep.subr.mxu0 0.0
    %820 = vmatpush1.msra.mxu0 0.0
    %821 = vmatprep.subr.mxu0 0.0
    %822 = vmatpush1.msra.mxu0 0.0
    %823 = vmatprep.subr.mxu0 0.0
    %824 = vmatpush1.msra.mxu0 0.0
    %825 = vmatprep.subr.mxu0 0.0
    %826 = vmatpush1.msra.mxu0 0.0
    %827 = vmatprep.subr.mxu0 0.0
    %828 = vmatpush1.msra.mxu0 0.0
    %829 = vmatprep.subr.mxu0 0.0
    %830 = vmatpush1.msra.mxu0 0.0
    %831 = vmatprep.subr.mxu0 0.0
    %832 = vmatpush1.msra.mxu0 0.0
    %833 = vmatprep.subr.mxu0 0.0
    %834 = vmatpush1.msra.mxu0 0.0
    %835 = vmatprep.subr.mxu0 0.0
    %836 = vmatpush1.msra.mxu0 0.0
    %837 = vmatprep.subr.mxu0 0.0
    %838 = vmatpush1.msra.mxu0 0.0
    %839 = vmatprep.subr.mxu0 0.0
    %840 = vmatpush1.msra.mxu0 0.0
    %841 = vmatprep.subr.mxu0 0.0
    %842 = vmatpush1.msra.mxu0 0.0
    %843 = vmatprep.subr.mxu0 0.0
    %844 = vmatpush1.msra.mxu0 0.0
    %845 = vmatprep.subr.mxu0 0.0
    %846 = vmatpush1.msra.mxu0 0.0
    %847 = vmatprep.subr.mxu0 0.0
    %848 = vmatpush1.msra.mxu0 0.0
    %849 = vmatprep.subr.mxu0 0.0
    %850 = vmatpush1.msra.mxu0 0.0
    %851 = vmatprep.mubr.f32.mxu0 0.0
    %852 = vmatmul.mubr.f32.gmra.mrb[0].mxu0 %v776
    %v853 = vpop.f32.mrb[0].mxu0
    %v854 = vadd.f32 %v757, %v853
    %v855 = vpop.f32.mrb[0].mxu0
    %856 = vmatprep.mubr.f32.mxu0 0.0
    %857 = vmatmul.mubr.f32.gmra.mrb[0].mxu0 %v779
    %v858 = vpop.f32.mrb[0].mxu0
    %v859 = vadd.f32 %v762, %v858
    %v860 = vpop.f32.mrb[0].mxu0
    %861 = vmatprep.mubr.f32.mxu0 0.0
    %862 = vmatmul.mubr.f32.gmra.mrb[0].mxu0 %v782
    %v863 = vpop.f32.mrb[0].mxu0
    %v864 = vadd.f32 %v767, %v863
    %v865 = vpop.f32.mrb[0].mxu0
    %866 = vmatprep.mubr.f32.mxu0 0.0
    %867 = vmatmul.mubr.f32.gmra.mrb[0].mxu0 %v785
    %v868 = vpop.f32.mrb[0].mxu0
    %v869 = vadd.f32 %v772, %v868
    %v870 = vpop.f32.mrb[0].mxu0
    %871 = vdwg.mxu0
    %v872 = vld [vmem:[#allocation2 + $0x2] sm:$0xff]
    %v873 = vld [vmem:[#allocation2 + $0xa] sm:$0xff]
    %v874 = vld [vmem:[#allocation2 + $0x1a] sm:$0xff]
    %v875 = vld [vmem:[#allocation2 + $0x22] sm:$0xff]
    %v877 = vsel %vm42, %v872, 0
    %v880 = vsel %vm42, %v873, 0
    %v883 = vsel %vm42, %v874, 0
    %v886 = vsel %vm42, %v875, 0
    %888 = vmatprep.subr.mxu0 0.0
    %889 = vmatpush1.msra.mxu0 %v659
    %890 = vmatprep.subr.mxu0 0.0
    %891 = vmatpush1.msra.mxu0 %v660
    %892 = vmatprep.subr.mxu0 0.0
    %893 = vmatpush1.msra.mxu0 %v661
    %894 = vmatprep.subr.mxu0 0.0
    %895 = vmatpush1.msra.mxu0 %v662
    %896 = vmatprep.subr.mxu0 0.0
    %897 = vmatpush1.msra.mxu0 %v663
    %898 = vmatprep.subr.mxu0 0.0
    %899 = vmatpush1.msra.mxu0 %v664
    %900 = vmatprep.subr.mxu0 0.0
    %901 = vmatpush1.msra.mxu0 %v665
    %902 = vmatprep.subr.mxu0 0.0
    %903 = vmatpush1.msra.mxu0 %v666
    %904 = vmatprep.subr.mxu0 0.0
    %905 = vmatpush1.msra.mxu0 %v667
    %906 = vmatprep.subr.mxu0 0.0
    %907 = vmatpush1.msra.mxu0 0.0
    %908 = vmatprep.subr.mxu0 0.0
    %909 = vmatpush1.msra.mxu0 0.0
    %910 = vmatprep.subr.mxu0 0.0
    %911 = vmatpush1.msra.mxu0 0.0
    %912 = vmatprep.subr.mxu0 0.0
    %913 = vmatpush1.msra.mxu0 0.0
    %914 = vmatprep.subr.mxu0 0.0
    %915 = vmatpush1.msra.mxu0 0.0
    %916 = vmatprep.subr.mxu0 0.0
    %917 = vmatpush1.msra.mxu0 0.0
    %918 = vmatprep.subr.mxu0 0.0
    %919 = vmatpush1.msra.mxu0 0.0
    %920 = vmatprep.subr.mxu0 0.0
    %921 = vmatpush1.msra.mxu0 0.0
    %922 = vmatprep.subr.mxu0 0.0
    %923 = vmatpush1.msra.mxu0 0.0
    %924 = vmatprep.subr.mxu0 0.0
    %925 = vmatpush1.msra.mxu0 0.0
    %926 = vmatprep.subr.mxu0 0.0
    %927 = vmatpush1.msra.mxu0 0.0
    %928 = vmatprep.subr.mxu0 0.0
    %929 = vmatpush1.msra.mxu0 0.0
    %930 = vmatprep.subr.mxu0 0.0
    %931 = vmatpush1.msra.mxu0 0.0
    %932 = vmatprep.subr.mxu0 0.0
    %933 = vmatpush1.msra.mxu0 0.0
    %934 = vmatprep.subr.mxu0 0.0
    %935 = vmatpush1.msra.mxu0 0.0
    %936 = vmatprep.subr.mxu0 0.0
    %937 = vmatpush1.msra.mxu0 0.0
    %938 = vmatprep.subr.mxu0 0.0
    %939 = vmatpush1.msra.mxu0 0.0
    %940 = vmatprep.subr.mxu0 0.0
    %941 = vmatpush1.msra.mxu0 0.0
    %942 = vmatprep.subr.mxu0 0.0
    %943 = vmatpush1.msra.mxu0 0.0
    %944 = vmatprep.subr.mxu0 0.0
    %945 = vmatpush1.msra.mxu0 0.0
    %946 = vmatprep.subr.mxu0 0.0
    %947 = vmatpush1.msra.mxu0 0.0
    %948 = vmatprep.subr.mxu0 0.0
    %949 = vmatpush1.msra.mxu0 0.0
    %950 = vmatprep.subr.mxu0 0.0
    %951 = vmatpush1.msra.mxu0 0.0
    %952 = vmatprep.mubr.f32.mxu0 0.0
    %953 = vmatmul.mubr.f32.gmra.mrb[0].mxu0 %v877
    %v954 = vpop.f32.mrb[0].mxu0
    %v955 = vadd.f32 0.0, %v954
    %v956 = vpop.f32.mrb[0].mxu0
    %957 = vmatprep.mubr.f32.mxu0 0.0
    %958 = vmatmul.mubr.f32.gmra.mrb[0].mxu0 %v880
    %v959 = vpop.f32.mrb[0].mxu0
    %v960 = vadd.f32 0.0, %v959
    %v961 = vpop.f32.mrb[0].mxu0
    %962 = vmatprep.mubr.f32.mxu0 0.0
    %963 = vmatmul.mubr.f32.gmra.mrb[0].mxu0 %v883
    %v964 = vpop.f32.mrb[0].mxu0
    %v965 = vadd.f32 0.0, %v964
    %v966 = vpop.f32.mrb[0].mxu0
    %967 = vmatprep.mubr.f32.mxu0 0.0
    %968 = vmatmul.mubr.f32.gmra.mrb[0].mxu0 %v886
    %v969 = vpop.f32.mrb[0].mxu0
    %v970 = vadd.f32 0.0, %v969
    %v971 = vpop.f32.mrb[0].mxu0
    %972 = vdwg.mxu0
    %v973 = vadd.f32 %v854, %v955
    %v974 = vadd.f32 %v859, %v960
    %v975 = vadd.f32 %v864, %v965
    %v976 = vadd.f32 %v869, %v970
    %v977 = vsel %vm407, %v973, 0.0
    %v978 = vsel %vm407, %v974, 0.0
    %v979 = vadd.f32 %v977, %v978
    %v980 = vsel %vm407, %v975, 0.0
    %v981 = vadd.f32 %v979, %v980
    %v982 = vsel %vm407, %v976, 0.0
    %v983 = vadd.f32 %v981, %v982
    %v984 = vrot.slane %v983, 4
    %v985 = vadd.f32 %v983, %v984
    %v986 = vrot.slane %v985, 2
    %v987 = vadd.f32 %v985, %v986
    %v988 = vrot.slane %v987, 1
    %v989 = vadd.f32 %v987, %v988
    %v991 = vsel %vm407, %v989, 0
    %993 = vmatprep.subr.mxu0 0.0
    %994 = vmatpush1.msra.mxu0 %v34
    %995 = vmatprep.subr.mxu0 0.0
    %996 = vmatpush1.msra.mxu0 %v35
    %997 = vmatprep.subr.mxu0 0.0
    %998 = vmatpush1.msra.mxu0 %v36
    %999 = vmatprep.subr.mxu0 0.0
    %1000 = vmatpush1.msra.mxu0 %v37
    %1001 = vmatprep.subr.mxu0 0.0
    %1002 = vmatpush1.msra.mxu0 %v38
    %1003 = vmatprep.subr.mxu0 0.0
    %1004 = vmatpush1.msra.mxu0 %v39
    %1005 = vmatprep.subr.mxu0 0.0
    %1006 = vmatpush1.msra.mxu0 %v40
    %1007 = vmatprep.subr.mxu0 0.0
    %1008 = vmatpush1.msra.mxu0 %v41
    %1009 = vmatprep.subr.mxu0 0.0
    %1010 = vmatpush1.msra.mxu0 0.0
    %1011 = vmatprep.subr.mxu0 0.0
    %1012 = vmatpush1.msra.mxu0 0.0
    %1013 = vmatprep.subr.mxu0 0.0
    %1014 = vmatpush1.msra.mxu0 0.0
    %1015 = vmatprep.subr.mxu0 0.0
    %1016 = vmatpush1.msra.mxu0 0.0
    %1017 = vmatprep.subr.mxu0 0.0
    %1018 = vmatpush1.msra.mxu0 0.0
    %1019 = vmatprep.subr.mxu0 0.0
    %1020 = vmatpush1.msra.mxu0 0.0
    %1021 = vmatprep.subr.mxu0 0.0
    %1022 = vmatpush1.msra.mxu0 0.0
    %1023 = vmatprep.subr.mxu0 0.0
    %1024 = vmatpush1.msra.mxu0 0.0
    %1025 = vmatprep.subr.mxu0 0.0
    %1026 = vmatpush1.msra.mxu0 0.0
    %1027 = vmatprep.subr.mxu0 0.0
    %1028 = vmatpush1.msra.mxu0 0.0
    %1029 = vmatprep.subr.mxu0 0.0
    %1030 = vmatpush1.msra.mxu0 0.0
    %1031 = vmatprep.subr.mxu0 0.0
    %1032 = vmatpush1.msra.mxu0 0.0
    %1033 = vmatprep.subr.mxu0 0.0
    %1034 = vmatpush1.msra.mxu0 0.0
    %1035 = vmatprep.subr.mxu0 0.0
    %1036 = vmatpush1.msra.mxu0 0.0
    %1037 = vmatprep.subr.mxu0 0.0
    %1038 = vmatpush1.msra.mxu0 0.0
    %1039 = vmatprep.subr.mxu0 0.0
    %1040 = vmatpush1.msra.mxu0 0.0
    %1041 = vmatprep.subr.mxu0 0.0
    %1042 = vmatpush1.msra.mxu0 0.0
    %1043 = vmatprep.subr.mxu0 0.0
    %1044 = vmatpush1.msra.mxu0 0.0
    %1045 = vmatprep.subr.mxu0 0.0
    %1046 = vmatpush1.msra.mxu0 0.0
    %1047 = vmatprep.subr.mxu0 0.0
    %1048 = vmatpush1.msra.mxu0 0.0
    %1049 = vmatprep.subr.mxu0 0.0
    %1050 = vmatpush1.msra.mxu0 0.0
    %1051 = vmatprep.subr.mxu0 0.0
    %1052 = vmatpush1.msra.mxu0 0.0
    %1053 = vmatprep.subr.mxu0 0.0
    %1054 = vmatpush1.msra.mxu0 0.0
    %1055 = vmatprep.subr.mxu0 0.0
    %1056 = vmatpush1.msra.mxu0 0.0
    %1057 = vmatprep.mubr.f32.mxu0 0.0
    %1058 = vmatmul.mubr.f32.gmra.mrb[0].mxu0 %v991
    %v1059 = vpop.f32.mrb[0].mxu0
    %v1060 = vadd.f32 0.0, %v1059
    %v1061 = vpop.f32.mrb[0].mxu0
    %1062 = vdwg.mxu0
    %v1063 = vmul.f32 %v973, %v973
    %v1064 = vmul.f32 %v974, %v974
    %v1065 = vmul.f32 %v975, %v975
    %v1066 = vmul.f32 %v976, %v976
    %v1067 = vsel %vm407, %v1063, 0.0
    %v1068 = vsel %vm407, %v1064, 0.0
    %v1069 = vadd.f32 %v1067, %v1068
    %v1070 = vsel %vm407, %v1065, 0.0
    %v1071 = vadd.f32 %v1069, %v1070
    %v1072 = vsel %vm407, %v1066, 0.0
    %v1073 = vadd.f32 %v1071, %v1072
    %v1074 = vrot.slane %v1073, 4
    %v1075 = vadd.f32 %v1073, %v1074
    %v1076 = vrot.slane %v1075, 2
    %v1077 = vadd.f32 %v1075, %v1076
    %v1078 = vrot.slane %v1077, 1
    %v1079 = vadd.f32 %v1077, %v1078
    %v1081 = vsel %vm407, %v1079, 0
    %1083 = vmatprep.subr.mxu0 0.0
    %1084 = vmatpush1.msra.mxu0 %v34
    %1085 = vmatprep.subr.mxu0 0.0
    %1086 = vmatpush1.msra.mxu0 %v35
    %1087 = vmatprep.subr.mxu0 0.0
    %1088 = vmatpush1.msra.mxu0 %v36
    %1089 = vmatprep.subr.mxu0 0.0
    %1090 = vmatpush1.msra.mxu0 %v37
    %1091 = vmatprep.subr.mxu0 0.0
    %1092 = vmatpush1.msra.mxu0 %v38
    %1093 = vmatprep.subr.mxu0 0.0
    %1094 = vmatpush1.msra.mxu0 %v39
    %1095 = vmatprep.subr.mxu0 0.0
    %1096 = vmatpush1.msra.mxu0 %v40
    %1097 = vmatprep.subr.mxu0 0.0
    %1098 = vmatpush1.msra.mxu0 %v41
    %1099 = vmatprep.subr.mxu0 0.0
    %1100 = vmatpush1.msra.mxu0 0.0
    %1101 = vmatprep.subr.mxu0 0.0
    %1102 = vmatpush1.msra.mxu0 0.0
    %1103 = vmatprep.subr.mxu0 0.0
    %1104 = vmatpush1.msra.mxu0 0.0
    %1105 = vmatprep.subr.mxu0 0.0
    %1106 = vmatpush1.msra.mxu0 0.0
    %1107 = vmatprep.subr.mxu0 0.0
    %1108 = vmatpush1.msra.mxu0 0.0
    %1109 = vmatprep.subr.mxu0 0.0
    %1110 = vmatpush1.msra.mxu0 0.0
    %1111 = vmatprep.subr.mxu0 0.0
    %1112 = vmatpush1.msra.mxu0 0.0
    %1113 = vmatprep.subr.mxu0 0.0
    %1114 = vmatpush1.msra.mxu0 0.0
    %1115 = vmatprep.subr.mxu0 0.0
    %1116 = vmatpush1.msra.mxu0 0.0
    %1117 = vmatprep.subr.mxu0 0.0
    %1118 = vmatpush1.msra.mxu0 0.0
    %1119 = vmatprep.subr.mxu0 0.0
    %1120 = vmatpush1.msra.mxu0 0.0
    %1121 = vmatprep.subr.mxu0 0.0
    %1122 = vmatpush1.msra.mxu0 0.0
    %1123 = vmatprep.subr.mxu0 0.0
    %1124 = vmatpush1.msra.mxu0 0.0
    %1125 = vmatprep.subr.mxu0 0.0
    %1126 = vmatpush1.msra.mxu0 0.0
    %1127 = vmatprep.subr.mxu0 0.0
    %1128 = vmatpush1.msra.mxu0 0.0
    %1129 = vmatprep.subr.mxu0 0.0
    %1130 = vmatpush1.msra.mxu0 0.0
    %1131 = vmatprep.subr.mxu0 0.0
    %1132 = vmatpush1.msra.mxu0 0.0
    %1133 = vmatprep.subr.mxu0 0.0
    %1134 = vmatpush1.msra.mxu0 0.0
    %1135 = vmatprep.subr.mxu0 0.0
    %1136 = vmatpush1.msra.mxu0 0.0
    %1137 = vmatprep.subr.mxu0 0.0
    %1138 = vmatpush1.msra.mxu0 0.0
    %1139 = vmatprep.subr.mxu0 0.0
    %1140 = vmatpush1.msra.mxu0 0.0
    %1141 = vmatprep.subr.mxu0 0.0
    %1142 = vmatpush1.msra.mxu0 0.0
    %1143 = vmatprep.subr.mxu0 0.0
    %1144 = vmatpush1.msra.mxu0 0.0
    %1145 = vmatprep.subr.mxu0 0.0
    %1146 = vmatpush1.msra.mxu0 0.0
    %1147 = vmatprep.mubr.f32.mxu0 0.0
    %1148 = vmatmul.mubr.f32.gmra.mrb[0].mxu0 %v1081
    %v1149 = vpop.f32.mrb[0].mxu0
    %v1150 = vadd.f32 0.0, %v1149
    %v1151 = vpop.f32.mrb[0].mxu0
    %1152 = vdwg.mxu0
    %v1153 = vmul.f32 %v1060, 0.001953125
    %v1154 = vmul.f32 %v1150, 0.001953125
    %v1155 = vmul.f32 %v1153, %v1153
    %v1156 = vsub.f32 %v1154, %v1155
    %v1157 = vadd.f32 %v1156, 1e-05
    %v1158 = vrsqrt.pop %v1157
    %v1159 = vmul.f32 %v1158, %v668
    %v1160 = vlaneseq
    %v1161 = vshrl.u32 %v1160, 7
    %v1162 = vsub.s32 0, %v1161
    %v1163 = vrot.slane %v1153, %v1162
    %v1164 = vsub.f32 %v973, %v1163
    %v1165 = vsub.f32 %v974, %v1163
    %v1166 = vsub.f32 %v975, %v1163
    %v1167 = vsub.f32 %v976, %v1163
    %v1168 = vlaneseq
    %v1169 = vshrl.u32 %v1168, 7
    %v1170 = vsub.s32 0, %v1169
    %v1171 = vrot.slane %v1159, %v1170
    %v1172 = vmul.f32 %v1164, %v1171
    %v1173 = vmul.f32 %v1165, %v1171
    %v1174 = vmul.f32 %v1166, %v1171
    %v1175 = vmul.f32 %v1167, %v1171
    %v1177 = vlaneseq
    %v1178 = vshrl.u32 %v1177, 7
    %v1179 = vsub.s32 0, %v1178
    %v1180 = vrot.slane %v669, %v1179
    %v1182 = vadd.f32 %v1172, %v1180
    %v1183 = vadd.f32 %v1173, %v1180
    %v1184 = vadd.f32 %v1174, %v1180
    %v1185 = vadd.f32 %v1175, %v1180
    %v1186 = vadd.f32 %v1182, %v30
    %v1187 = vadd.f32 %v1183, %v31
    %v1188 = vadd.f32 %v1184, %v32
    %v1189 = vadd.f32 %v1185, %v33
    %v1190 = vmax.f32 %v1186, 0.0
    %v1191 = vmax.f32 %v1187, 0.0
    %v1192 = vmax.f32 %v1188, 0.0
    %v1193 = vmax.f32 %v1189, 0.0
    %1194 = vst.msk [vmem:[#allocation3] sm:$0xff] %vm407, %v1190
    %1195 = vst.msk [vmem:[#allocation3 + $0x8] sm:$0xff] %vm407, %v1191
    %1196 = vst.msk [vmem:[#allocation3 + $0x10] sm:$0xff] %vm407, %v1192
    %1197 = vst.msk [vmem:[#allocation3 + $0x18] sm:$0xff] %vm407, %v1193
    // Predicated region
    $region34: #{tpu_custom_call.1} parent=1 // pred_check
      _
    $region35: #{tpu_custom_call.1} parent=1 // pred_check_branch
      %1199 = sbr.rel (0) target = $region37
    $region36: #{tpu_custom_call.1} parent=1 // pred_region
      %s1201 = ssub.s32 512, 512
      %1202 = vsyncadd [#allocation4], %s1201
      %s1203 = sshll.u32 [#allocation3], 4
      %s1204 = int_to_ptr.vmem [resolvable:$true] %s1203
      %1209 = dma.vmem_to_hbm [thread:$0]  %s1204, 512, %s8, [#allocation4], 128, 128, 8
    $region37: #{tpu_custom_call.1} parent=1 // pred_fallthru
      _
    // Predicated region
    $region38: #{tpu_custom_call.1} parent=1 // pred_check
      _
    $region39: #{tpu_custom_call.1} parent=1 // pred_check_branch
      %1211 = sbr.rel (0) target = $region41
    $region40: #{tpu_custom_call.1} parent=1 // pred_region
      %1212 = dma.done [#allocation4], 512
    $region41: #{tpu_custom_call.1} parent=1 // pred_fallthru
      _
    %1213 = vsyncpa [#allocation4], 1

</llo_original>
